<compile_context>
chip_gen: v7x
topology: tpu7x:2x2x1
jax: 0.10.0
libtpu: 0.0.40
codegen_flags: <defaults>
</compile_context>

<pallas_src>
import jax
import jax.numpy as jnp
from jax.experimental import pallas as pl
from jax.experimental.pallas import tpu as pltpu


def mlp_kernel(x_ref, w1_ref, b1_ref, w2_ref, b2_ref, o_ref):
    x = x_ref[...]                            # (F, T)  lane-major batch tile
    w1 = w1_ref[...]                          # (H, F)

    # ---- hidden layer: W1 @ x + b1, ReLU ---------------------------------
    if x_ref.shape[0] == 1:
        # F == 1: broadcast outer product on the VPU (no K=1 MXU matmul).
        h = w1 * x                            # (H, 1) * (1, T) -> (H, T)
    else:
        h = jnp.dot(w1, x, preferred_element_type=jnp.float32)
    h = jnp.maximum(h + b1_ref[...], 0.0)     # (H, T) + (H, 1) lane-broadcast

    # ---- output layer: W2 @ h + b2 on the MXU -----------------------------
    y = jnp.dot(w2_ref[...], h, preferred_element_type=jnp.float32)  # (O, T)
    o_ref[...] = (y + b2_ref[...]).astype(o_ref.dtype)               # +(O, 1)


def net_forward(x, w1, b1, w2, b2, *, max_lane_tile=1024):
    """PyTorch-convention params: x (N,F); w1 (H,F); b1 (H,); w2 (O,H); b2 (O,)."""
    N, F = x.shape
    H = w1.shape[0]
    O = w2.shape[0]

    # Lane-major batch.  For F == 1 the transpose is a pure reshape (no copy).
    x_t = x.reshape(1, N) if F == 1 else x.T                 # (F, N)
    b1_col = b1.reshape(H, 1)
    b2_col = b2.reshape(O, 1)

    # Tile selection.  The lane block must be a multiple of 128; Pallas masks
    # the partial last block, so no wrapper-side padding of N is needed.
    n_pad = pl.cdiv(N, 128) * 128
    if n_pad >= 256:
        # Keep >= 2 tiles so both v7x TensorCores get work (no-op on v5e/v6e),
        # capped at max_lane_tile to bound vreg / VMEM pressure.
        lane_tile = min(max_lane_tile, pl.cdiv(n_pad // 2, 128) * 128)
    else:
        lane_tile = n_pad                     # whole (tiny) batch in one tile
    grid = (pl.cdiv(N, lane_tile),)

    out = pl.pallas_call(
        mlp_kernel,
        out_shape=jax.ShapeDtypeStruct((O, N), x.dtype),
        grid=grid,
        in_specs=[
            pl.BlockSpec((F, lane_tile), lambda i: (0, i)),   # x tile (lane-dense)
            pl.BlockSpec((H, F), lambda i: (0, 0)),           # W1, resident
            pl.BlockSpec((H, 1), lambda i: (0, 0)),           # b1 column
            pl.BlockSpec((O, H), lambda i: (0, 0)),           # W2, resident
            pl.BlockSpec((O, 1), lambda i: (0, 0)),           # b2 column
        ],
        out_specs=pl.BlockSpec((O, lane_tile), lambda i: (0, i)),
        compiler_params=pltpu.CompilerParams(
            dimension_semantics=("parallel",)),               # batch tiles independent
    )(x_t, w1, b1_col, w2, b2_col)

    # Back to PyTorch-style (N, O); for O == 1 this is a free reshape.
    return out.reshape(N, O) if O == 1 else out.T


def reference_forward(x, w1, b1, w2, b2):
    h = jnp.maximum(x @ w1.T + b1, 0.0)
    return h @ w2.T + b2


if __name__ == "__main__":
    # Shapes implied by the original script: x = linspace(-1, 1, 100)[:, None]
    # i.e. (N=100, n_features=1); pick n_hidden=32, n_output=1.
    N, F, H, O = 100, 1, 32, 1

    key = jax.random.PRNGKey(0)
    k1, k2, k3, k4 = jax.random.split(key, 4)

    # Input matching the PyTorch script: 100 points in [-1, 1], one feature.
    x = jnp.linspace(-1.0, 1.0, N, dtype=jnp.float32).reshape(N, F)

    # Deterministic parameter init (PyTorch-Linear-style uniform ranges),
    # stored in PyTorch's (out, in) weight convention.
    bound1 = 1.0 / jnp.sqrt(jnp.float32(F))
    bound2 = 1.0 / jnp.sqrt(jnp.float32(H))
    w1 = jax.random.uniform(k1, (H, F), jnp.float32, -bound1, bound1)
    b1 = jax.random.uniform(k2, (H,), jnp.float32, -bound1, bound1)
    w2 = jax.random.uniform(k3, (O, H), jnp.float32, -bound2, bound2)
    b2 = jax.random.uniform(k4, (O,), jnp.float32, -bound2, bound2)

    y = net_forward(x, w1, b1, w2, b2)
    y = jax.block_until_ready(y)

    y_ref = reference_forward(x, w1, b1, w2, b2)
    assert y.shape == (N, O), y.shape
    assert jnp.allclose(y, y_ref, atol=1e-5, rtol=1e-5), "mismatch vs reference"

    print("KERNEL_OK")
</pallas_src>

<mosaic_0001>
module attributes {stable_mosaic.version = 11 : i64} {
  func.func @mlp_kernel(%arg0: i32, %arg1: memref<1x128xf32, #tpu.memory_space<vmem>>, %arg2: memref<32x1xf32, #tpu.memory_space<vmem>>, %arg3: memref<32x1xf32, #tpu.memory_space<vmem>>, %arg4: memref<1x32xf32, #tpu.memory_space<vmem>>, %arg5: memref<1x1xf32, #tpu.memory_space<vmem>>, %arg6: memref<1x128xf32, #tpu.memory_space<vmem>>) attributes {dimension_semantics = [#tpu.dimension_semantics<parallel>], iteration_bounds = array<i64: 1>, scalar_prefetch = 0 : i64, scratch_operands = 0 : i64, tpu.core_type = #tpu.core_type<tc>, window_params = [{transform_indices = @transform_0, window_bounds = array<i64: 1, 128>}, {pipeline_mode = #tpu.pipeline_mode<synchronous>, transform_indices = @transform_1, window_bounds = array<i64: 32, 1>}, {pipeline_mode = #tpu.pipeline_mode<synchronous>, transform_indices = @transform_2, window_bounds = array<i64: 32, 1>}, {pipeline_mode = #tpu.pipeline_mode<synchronous>, transform_indices = @transform_3, window_bounds = array<i64: 1, 32>}, {pipeline_mode = #tpu.pipeline_mode<synchronous>, transform_indices = @transform_4, window_bounds = array<i64: 1, 1>}, {transform_indices = @transform_5, window_bounds = array<i64: 1, 128>}]} {
    %c0 = arith.constant 0 : index
    %c0_0 = arith.constant 0 : index
    %0 = vector.load %arg1[%c0, %c0_0] : memref<1x128xf32, #tpu.memory_space<vmem>>, vector<1x128xf32>
    %c0_1 = arith.constant 0 : index
    %c0_2 = arith.constant 0 : index
    %1 = vector.load %arg2[%c0_1, %c0_2] : memref<32x1xf32, #tpu.memory_space<vmem>>, vector<32x1xf32>
    %2 = vector.broadcast %1 : vector<32x1xf32> to vector<32x128xf32>
    %3 = vector.broadcast %0 : vector<1x128xf32> to vector<32x128xf32>
    %4 = arith.mulf %2, %3 : vector<32x128xf32>
    %c0_3 = arith.constant 0 : index
    %c0_4 = arith.constant 0 : index
    %5 = vector.load %arg3[%c0_3, %c0_4] : memref<32x1xf32, #tpu.memory_space<vmem>>, vector<32x1xf32>
    %6 = vector.broadcast %5 : vector<32x1xf32> to vector<32x128xf32>
    %7 = arith.addf %4, %6 : vector<32x128xf32>
    %cst = arith.constant 0.000000e+00 : f32
    %8 = vector.broadcast %cst : f32 to vector<32x128xf32>
    %9 = arith.maximumf %7, %8 : vector<32x128xf32>
    %c0_5 = arith.constant 0 : index
    %c0_6 = arith.constant 0 : index
    %10 = vector.load %arg4[%c0_5, %c0_6] : memref<1x32xf32, #tpu.memory_space<vmem>>, vector<1x32xf32>
    %cst_7 = arith.constant dense<0.000000e+00> : vector<1x128xf32>
    %11 = tpu.matmul %10, %9, %cst_7 {dimension_numbers = #tpu.dot_dimension_numbers<[1], [0], [0], [1], [0, 0, 1, 1], [], []>} : vector<1x32xf32>, vector<32x128xf32>, vector<1x128xf32> -> vector<1x128xf32>
    %c0_8 = arith.constant 0 : index
    %c0_9 = arith.constant 0 : index
    %12 = vector.load %arg5[%c0_8, %c0_9] : memref<1x1xf32, #tpu.memory_space<vmem>>, vector<1x1xf32>
    %13 = vector.broadcast %12 : vector<1x1xf32> to vector<1x128xf32>
    %14 = arith.addf %11, %13 : vector<1x128xf32>
    %c0_10 = arith.constant 0 : index
    %c0_11 = arith.constant 0 : index
    %15 = vector.load %arg6[%c0_10, %c0_11] : memref<1x128xf32, #tpu.memory_space<vmem>>, vector<1x128xf32>
    tpu.vector_store %arg6[%c0_10, %c0_11], %14 {strides = array<i32>} : memref<1x128xf32, #tpu.memory_space<vmem>>, vector<1x128xf32>,
    return
  }
  func.func @transform_0(%arg0: i32) -> (i32, i32) {
    %c0_i32 = arith.constant 0 : i32
    %c0_i32_0 = arith.constant 0 : i32
    return %c0_i32, %arg0 : i32, i32
  }
  func.func @transform_1(%arg0: i32) -> (i32, i32) {
    %c0_i32 = arith.constant 0 : i32
    %c0_i32_0 = arith.constant 0 : i32
    %c0_i32_1 = arith.constant 0 : i32
    return %c0_i32, %c0_i32_0 : i32, i32
  }
  func.func @transform_2(%arg0: i32) -> (i32, i32) {
    %c0_i32 = arith.constant 0 : i32
    %c0_i32_0 = arith.constant 0 : i32
    %c0_i32_1 = arith.constant 0 : i32
    return %c0_i32, %c0_i32_0 : i32, i32
  }
  func.func @transform_3(%arg0: i32) -> (i32, i32) {
    %c0_i32 = arith.constant 0 : i32
    %c0_i32_0 = arith.constant 0 : i32
    %c0_i32_1 = arith.constant 0 : i32
    return %c0_i32, %c0_i32_0 : i32, i32
  }
  func.func @transform_4(%arg0: i32) -> (i32, i32) {
    %c0_i32 = arith.constant 0 : i32
    %c0_i32_0 = arith.constant 0 : i32
    %c0_i32_1 = arith.constant 0 : i32
    return %c0_i32, %c0_i32_0 : i32, i32
  }
  func.func @transform_5(%arg0: i32) -> (i32, i32) {
    %c0_i32 = arith.constant 0 : i32
    %c0_i32_0 = arith.constant 0 : i32
    return %c0_i32, %arg0 : i32, i32
  }
}

</mosaic_0001>

<llo_original>
// kernel: tpu_custom_call.1
$region0: #{tpu_custom_call.1}
  #allocation0 [shape = 'u32[]', space=smem, size = 0x4, offset = 0x4, fixed_abs, tag = 'smem constant byte address 0x4 - core index']
  #allocation1 [shape = 'u32[144,128]{1,0:T(1,128)}', space=vmem, size = 0x12000, scoped, tag = 'internal scratch']
  #allocation2 [shape = 'f32[1,1]{1,0:T(1,128)S(1)}', space=vmem, size = 0x200, scoped, tag = 'scoped memory for tpu_custom_call.1']
  %s0 = inlined_call_operand.vmem [shape: f32[1,100], index: 0, kind: input, shape index: {}]
  %s1 = inlined_call_operand.vmem [shape: f32[32,1], index: 1, kind: input, shape index: {}]
  %s2 = inlined_call_operand.vmem [shape: f32[32,1], index: 2, kind: input, shape index: {}]
  %s3 = inlined_call_operand.vmem [shape: f32[1,32], index: 3, kind: input, shape index: {}]
  %s4 = inlined_call_operand.<no memory space> [shape: f32[1,1], index: 4, kind: input, shape index: {}]
  %s5 = inlined_call_operand.hbm [shape: f32[1,100], index: 5, kind: output, shape index: {}]
  %s6 = sld [smem:[#allocation0]]
  $region30: #{tpu_custom_call.1} parent=0
    _
  %s8 = ssub.s32 1, %s6
  %s9 = scalar_select 0, %s8, %s6
  %v10 = vstv %s4
  %11 = vst [vmem:[#allocation2] sm:$0x1] %v10
  $region1: #{tpu_custom_call.1} parent=0
    #allocation3 [shape = 'u8[512]{0}', space=vmem, size = 0x400, scoped, tag = 'output window, operand 0, single buffered']
    #allocation4 [shape = 's32[1]{0}', space=sflag, size = 0x4, scoped, tag = 'scoped memory for tpu_custom_call.1']
    %12 = vsyncpa [#allocation4], 0
    // Predicated region
    $region2: #{tpu_custom_call.1} parent=1 // pred_check
      _
    $region3: #{tpu_custom_call.1} parent=1 // pred_check_branch
      %14 = sbr.rel (0) target = $region5
    $region4: #{tpu_custom_call.1} parent=1 // pred_region
      _
    $region5: #{tpu_custom_call.1} parent=1 // pred_fallthru
      _
    // Predicated region
    $region6: #{tpu_custom_call.1} parent=1 // pred_check
      _
    $region7: #{tpu_custom_call.1} parent=1 // pred_check_branch
      %16 = sbr.rel (0) target = $region9
    $region8: #{tpu_custom_call.1} parent=1 // pred_region
      _
    $region9: #{tpu_custom_call.1} parent=1 // pred_fallthru
      _
    // Predicated region
    $region10: #{tpu_custom_call.1} parent=1 // pred_check
      _
    $region11: #{tpu_custom_call.1} parent=1 // pred_check_branch
      %18 = sbr.rel (0) target = $region13
    $region12: #{tpu_custom_call.1} parent=1 // pred_region
      _
    $region13: #{tpu_custom_call.1} parent=1 // pred_fallthru
      _
    // Predicated region
    $region14: #{tpu_custom_call.1} parent=1 // pred_check
      _
    $region15: #{tpu_custom_call.1} parent=1 // pred_check_branch
      %20 = sbr.rel (0) target = $region17
    $region16: #{tpu_custom_call.1} parent=1 // pred_region
      _
    $region17: #{tpu_custom_call.1} parent=1 // pred_fallthru
      _
    // Predicated region
    $region18: #{tpu_custom_call.1} parent=1 // pred_check
      _
    $region19: #{tpu_custom_call.1} parent=1 // pred_check_branch
      %22 = sbr.rel (0) target = $region21
    $region20: #{tpu_custom_call.1} parent=1 // pred_region
      _
    $region21: #{tpu_custom_call.1} parent=1 // pred_fallthru
      _
    %v23 = vld [vmem:[%s0] sm:$0x1]
    %v24 = vld [vmem:[%s1] sm:$0xff]
    %v25 = vld [vmem:[%s1 + $0x8] sm:$0xff]
    %v26 = vld [vmem:[%s1 + $0x10] sm:$0xff]
    %v27 = vld [vmem:[%s1 + $0x18] sm:$0xff]
    %29 = vset.pattern.permute.xlu0 0
    %30 = vperm.xlu0 %29, %v24
    %v31 = vpop.permute.xlu0 %30
    %34 = vset.pattern.permute.xlu0 0
    %35 = vperm.xlu0 %34, %v25
    %v36 = vpop.permute.xlu0 %35
    %39 = vset.pattern.permute.xlu0 0
    %40 = vperm.xlu0 %39, %v26
    %v41 = vpop.permute.xlu0 %40
    %44 = vset.pattern.permute.xlu0 0
    %45 = vperm.xlu0 %44, %v27
    %v46 = vpop.permute.xlu0 %45
    %v49 = vlaneseq
    %v50 = vshrl.u32 %v49, 7
    %v51 = vsub.s32 0, %v50
    %v52 = vrot.slane %v23, %v51
    %v54 = vmul.f32 %v31, %v52
    %v55 = vmul.f32 %v36, %v52
    %v56 = vmul.f32 %v41, %v52
    %v57 = vmul.f32 %v46, %v52
    %v58 = vld [vmem:[%s2] sm:$0xff]
    %v59 = vld [vmem:[%s2 + $0x8] sm:$0xff]
    %v60 = vld [vmem:[%s2 + $0x10] sm:$0xff]
    %v61 = vld [vmem:[%s2 + $0x18] sm:$0xff]
    %63 = vset.pattern.permute.xlu0 0
    %64 = vperm.xlu0 %63, %v58
    %v65 = vpop.permute.xlu0 %64
    %68 = vset.pattern.permute.xlu0 0
    %69 = vperm.xlu0 %68, %v59
    %v70 = vpop.permute.xlu0 %69
    %73 = vset.pattern.permute.xlu0 0
    %74 = vperm.xlu0 %73, %v60
    %v75 = vpop.permute.xlu0 %74
    %78 = vset.pattern.permute.xlu0 0
    %79 = vperm.xlu0 %78, %v61
    %v80 = vpop.permute.xlu0 %79
    %v82 = vadd.f32 %v54, %v65
    %v83 = vadd.f32 %v55, %v70
    %v84 = vadd.f32 %v56, %v75
    %v85 = vadd.f32 %v57, %v80
    %v86 = vmax.f32 %v82, 0.0
    %v87 = vmax.f32 %v83, 0.0
    %v88 = vmax.f32 %v84, 0.0
    %v89 = vmax.f32 %v85, 0.0
    %v90 = vld [vmem:[%s3] sm:$0x1]
    %v91 = vld [vmem:[#allocation2] sm:$0x1]
    %93 = vset.pattern.permute.xlu0 0
    %94 = vperm.xlu0 %93, %v91
    %v95 = vpop.permute.xlu0 %94
    %v97 = vlaneseq
    %v98 = vshrl.u32 %v97, 7
    %v99 = vsub.s32 0, %v98
    %v100 = vrot.slane %v95, %v99
    %vm101 = vcmask 261120
    %v103 = vsel %vm101, %v90, 0
    %105 = vmatprep.subr.mxu0 0.0
    %106 = vmatpush1.msra.mxu0 %v86
    %107 = vmatprep.subr.mxu0 0.0
    %108 = vmatpush1.msra.mxu0 %v87
    %109 = vmatprep.subr.mxu0 0.0
    %110 = vmatpush1.msra.mxu0 %v88
    %111 = vmatprep.subr.mxu0 0.0
    %112 = vmatpush1.msra.mxu0 %v89
    %113 = vmatprep.subr.mxu0 0.0
    %114 = vmatpush1.msra.mxu0 0.0
    %115 = vmatprep.subr.mxu0 0.0
    %116 = vmatpush1.msra.mxu0 0.0
    %117 = vmatprep.subr.mxu0 0.0
    %118 = vmatpush1.msra.mxu0 0.0
    %119 = vmatprep.subr.mxu0 0.0
    %120 = vmatpush1.msra.mxu0 0.0
    %121 = vmatprep.subr.mxu0 0.0
    %122 = vmatpush1.msra.mxu0 0.0
    %123 = vmatprep.subr.mxu0 0.0
    %124 = vmatpush1.msra.mxu0 0.0
    %125 = vmatprep.subr.mxu0 0.0
    %126 = vmatpush1.msra.mxu0 0.0
    %127 = vmatprep.subr.mxu0 0.0
    %128 = vmatpush1.msra.mxu0 0.0
    %129 = vmatprep.subr.mxu0 0.0
    %130 = vmatpush1.msra.mxu0 0.0
    %131 = vmatprep.subr.mxu0 0.0
    %132 = vmatpush1.msra.mxu0 0.0
    %133 = vmatprep.subr.mxu0 0.0
    %134 = vmatpush1.msra.mxu0 0.0
    %135 = vmatprep.subr.mxu0 0.0
    %136 = vmatpush1.msra.mxu0 0.0
    %137 = vmatprep.subr.mxu0 0.0
    %138 = vmatpush1.msra.mxu0 0.0
    %139 = vmatprep.subr.mxu0 0.0
    %140 = vmatpush1.msra.mxu0 0.0
    %141 = vmatprep.subr.mxu0 0.0
    %142 = vmatpush1.msra.mxu0 0.0
    %143 = vmatprep.subr.mxu0 0.0
    %144 = vmatpush1.msra.mxu0 0.0
    %145 = vmatprep.subr.mxu0 0.0
    %146 = vmatpush1.msra.mxu0 0.0
    %147 = vmatprep.subr.mxu0 0.0
    %148 = vmatpush1.msra.mxu0 0.0
    %149 = vmatprep.subr.mxu0 0.0
    %150 = vmatpush1.msra.mxu0 0.0
    %151 = vmatprep.subr.mxu0 0.0
    %152 = vmatpush1.msra.mxu0 0.0
    %153 = vmatprep.subr.mxu0 0.0
    %154 = vmatpush1.msra.mxu0 0.0
    %155 = vmatprep.subr.mxu0 0.0
    %156 = vmatpush1.msra.mxu0 0.0
    %157 = vmatprep.subr.mxu0 0.0
    %158 = vmatpush1.msra.mxu0 0.0
    %159 = vmatprep.subr.mxu0 0.0
    %160 = vmatpush1.msra.mxu0 0.0
    %161 = vmatprep.subr.mxu0 0.0
    %162 = vmatpush1.msra.mxu0 0.0
    %163 = vmatprep.subr.mxu0 0.0
    %164 = vmatpush1.msra.mxu0 0.0
    %165 = vmatprep.subr.mxu0 0.0
    %166 = vmatpush1.msra.mxu0 0.0
    %167 = vmatprep.subr.mxu0 0.0
    %168 = vmatpush1.msra.mxu0 0.0
    %169 = vmatprep.mubr.f32.mxu0 0.0
    %170 = vmatmul.mubr.f32.gmra.mrb[0].mxu0 %v103
    %v171 = vpop.f32.mrb[0].mxu0
    %v172 = vadd.f32 %v100, %v171
    %v173 = vpop.f32.mrb[0].mxu0
    %174 = vdwg.mxu0
    %175 = vst [vmem:[#allocation3] sm:$0x1] %v172
    // Predicated region
    $region22: #{tpu_custom_call.1} parent=1 // pred_check
      _
    $region23: #{tpu_custom_call.1} parent=1 // pred_check_branch
      %177 = sbr.rel (0) target = $region25
    $region24: #{tpu_custom_call.1} parent=1 // pred_region
      %s179 = ssub.s32 16, 16
      %180 = vsyncadd [#allocation4], %s179
      %s182 = sshll.u32 [#allocation3], 4
      %s183 = int_to_ptr.vmem [resolvable:$true] %s182
      %185 = dma.vmem_to_hbm [thread:$0]  %s183, 16, %s5, [#allocation4]
    $region25: #{tpu_custom_call.1} parent=1 // pred_fallthru
      _
    // Predicated region
    $region26: #{tpu_custom_call.1} parent=1 // pred_check
      _
    $region27: #{tpu_custom_call.1} parent=1 // pred_check_branch
      %187 = sbr.rel (0) target = $region29
    $region28: #{tpu_custom_call.1} parent=1 // pred_region
      %188 = dma.done [#allocation4], 16
    $region29: #{tpu_custom_call.1} parent=1 // pred_fallthru
      _
    %189 = vsyncpa [#allocation4], 1

</llo_original>
